<compile_context>
chip_gen: v7x
topology: tpu7x:2x2x1
jax: 0.10.0
libtpu: 0.0.40
codegen_flags: <defaults>
</compile_context>

<pallas_src>
import functools

import jax
import jax.numpy as jnp
from jax.experimental import pallas as pl
from jax.experimental.pallas import tpu as pltpu

_LEAKY_SLOPE = 1.0  # nn.LeakyReLU(True) -> negative_slope = float(True) = 1.0


def _generator_kernel(d_ref, w_ref, b_ref, o_ref):
    # One fused affine map + sigmoid.  Compute in f32 regardless of I/O dtype;
    # exp and the approximate reciprocal both run on the otherwise idle EUP.
    x = d_ref[...].astype(jnp.float32)
    h = jnp.dot(x, w_ref[...], preferred_element_type=jnp.float32) + b_ref[...]
    e = jnp.exp(-h)
    o_ref[...] = pl.reciprocal(1.0 + e, approx=True).astype(o_ref.dtype)


def _pick_pack_factor(M, n, max_lanes=256):
    """Largest k with n*k <= max_lanes, M % k == 0 (free contiguous reshape)
    and at least 8 packed rows when the problem is big enough (full sublanes).
    k = 1 is always a valid fallback."""
    k = max(1, max_lanes // max(n, 1))
    while k > 1 and (M % k != 0 or M // k < 8):
        k -= 1
    return k


def fuse_and_pack_params(params, k):
    """Collapse the 3 Linears (activations are identity, slope 1.0) and build
    the lane-dense block-diagonal weight / tiled bias.  Pure JAX and tiny;
    hoist this out of the step loop when the discriminator weights are static."""
    w1, b1, w2, b2, w3, b3 = params
    wf = jnp.dot(jnp.dot(w1, w2), w3)                          # (n, n)
    bf = jnp.dot(jnp.dot(b1, w2), w3) + jnp.dot(b2, w3) + b3   # (1, n)
    w_packed = jnp.kron(jnp.eye(k, dtype=wf.dtype), wf)        # (n*k, n*k)
    b_packed = jnp.tile(bf, (1, k))                            # (1, n*k)
    return w_packed, b_packed


@functools.partial(jax.jit, static_argnames=("block_m", "max_lanes"))
def generator_forward(d, params, block_m=512, max_lanes=256):
    """d: (B, win_size, n_feats) -> validity of the same shape/dtype.

    block_m:  row tile in *packed* rows (multiple of 8 recommended).
    max_lanes: target packed lane width (256 feeds a full v6e/v7x MXU pass;
               128 is enough for v5e's 128-wide MXU / single store slot).
    """
    B, S, n = d.shape
    M = B * S

    # Static (shape-derived) packing factor.
    k = _pick_pack_factor(M, n, max_lanes)
    nk = n * k
    Mp = M // k

    w_packed, b_packed = fuse_and_pack_params(params, k)
    d2 = d.reshape(Mp, nk)                      # free contiguous view, no pad

    # Fixed moderate tile; many parallel steps for large M.  The last block may
    # overhang Mp (rows are independent; OOB writes are masked by Pallas).
    if Mp <= block_m:
        tm = Mp                                 # single block == full extent
    else:
        tm = max(8, (block_m // 8) * 8)         # sublane-aligned tile

    grid = (pl.cdiv(Mp, tm),)

    out2 = pl.pallas_call(
        _generator_kernel,
        out_shape=jax.ShapeDtypeStruct((Mp, nk), d.dtype),
        grid_spec=pltpu.PrefetchScalarGridSpec(
            num_scalar_prefetch=0,
            grid=grid,
            in_specs=[
                pl.BlockSpec((tm, nk), lambda i: (i, 0)),  # activations (row-tiled)
                pl.BlockSpec((nk, nk), lambda i: (0, 0)),  # packed fused weight (resident)
                pl.BlockSpec((1, nk), lambda i: (0, 0)),   # packed fused bias (resident)
            ],
            out_specs=pl.BlockSpec((tm, nk), lambda i: (i, 0)),
        ),
        compiler_params=pltpu.CompilerParams(
            dimension_semantics=("parallel",)),
    )(d2, w_packed, b_packed)

    return out2.reshape(B, S, n)


def init_generator_params(key, input_c):
    """Deterministic init of the discriminator Linear layers (PyTorch-style
    uniform(-1/sqrt(fan_in), 1/sqrt(fan_in))).  Weights stored as (in, out)."""
    n = input_c
    n_hidden = n // 2 + 1
    ks = jax.random.split(key, 6)

    def lin(kw, kb, fan_in, fan_out):
        bound = 1.0 / jnp.sqrt(jnp.float32(fan_in))
        w = jax.random.uniform(kw, (fan_in, fan_out), jnp.float32, -bound, bound)
        b = jax.random.uniform(kb, (1, fan_out), jnp.float32, -bound, bound)
        return w, b

    w1, b1 = lin(ks[0], ks[1], n, n_hidden)
    w2, b2 = lin(ks[2], ks[3], n_hidden, n_hidden)
    w3, b3 = lin(ks[4], ks[5], n_hidden, n)
    return (w1, b1, w2, b2, w3, b3)


def _reference_forward(d, params):
    """Pure-JAX reference: the unfused 3-layer MLP exactly as PyTorch runs it."""
    w1, b1, w2, b2, w3, b3 = params
    h = d @ w1 + b1
    h = jnp.where(h >= 0, h, _LEAKY_SLOPE * h)   # identity (slope = 1.0)
    h = h @ w2 + b2
    h = jnp.where(h >= 0, h, _LEAKY_SLOPE * h)   # identity (slope = 1.0)
    h = h @ w3 + b3
    return jax.nn.sigmoid(h)


if __name__ == "__main__":
    key = jax.random.PRNGKey(0)
    k_param, k_data = jax.random.split(key)

    # Small shapes consistent with the module: batch=2, win_size=8, input_c=16
    B, win_size, input_c = 2, 8, 16
    params = init_generator_params(k_param, input_c)
    d = jax.random.normal(k_data, (B, win_size, input_c), jnp.float32)

    out = generator_forward(d, params)
    out = jax.block_until_ready(out)

    ref = _reference_forward(d, params)
    assert out.shape == (B, win_size, input_c)
    # Tolerance budget: the layer fusion is ~1e-6; the dominant term is the
    # approximate EUP reciprocal in the sigmoid (outputs lie in [0, 1], so an
    # absolute 1e-2 bound still catches any structural/indexing error).
    assert jnp.allclose(out, ref, atol=1e-2, rtol=1e-3), float(
        jnp.max(jnp.abs(out - ref)))

    print("KERNEL_OK")
</pallas_src>

<mosaic_0001>
module attributes {stable_mosaic.version = 11 : i64} {
  func.func @_generator_kernel(%arg0: i32, %arg1: memref<8x32xf32, #tpu.memory_space<vmem>>, %arg2: memref<32x32xf32, #tpu.memory_space<vmem>>, %arg3: memref<1x32xf32, #tpu.memory_space<vmem>>, %arg4: memref<8x32xf32, #tpu.memory_space<vmem>>) attributes {dimension_semantics = [#tpu.dimension_semantics<parallel>], iteration_bounds = array<i64: 1>, scalar_prefetch = 0 : i64, scratch_operands = 0 : i64, tpu.core_type = #tpu.core_type<tc>, window_params = [{transform_indices = @transform_0, window_bounds = array<i64: 8, 32>}, {pipeline_mode = #tpu.pipeline_mode<synchronous>, transform_indices = @transform_1, window_bounds = array<i64: 32, 32>}, {pipeline_mode = #tpu.pipeline_mode<synchronous>, transform_indices = @transform_2, window_bounds = array<i64: 1, 32>}, {transform_indices = @transform_3, window_bounds = array<i64: 8, 32>}]} {
    %c0 = arith.constant 0 : index
    %c0_0 = arith.constant 0 : index
    %0 = vector.load %arg1[%c0, %c0_0] : memref<8x32xf32, #tpu.memory_space<vmem>>, vector<8x32xf32>
    %c0_1 = arith.constant 0 : index
    %c0_2 = arith.constant 0 : index
    %1 = vector.load %arg2[%c0_1, %c0_2] : memref<32x32xf32, #tpu.memory_space<vmem>>, vector<32x32xf32>
    %cst = arith.constant dense<0.000000e+00> : vector<8x32xf32>
    %2 = tpu.matmul %0, %1, %cst {dimension_numbers = #tpu.dot_dimension_numbers<[1], [0], [0], [1], [0, 0, 1, 1], [], []>} : vector<8x32xf32>, vector<32x32xf32>, vector<8x32xf32> -> vector<8x32xf32>
    %c0_3 = arith.constant 0 : index
    %c0_4 = arith.constant 0 : index
    %3 = vector.load %arg3[%c0_3, %c0_4] : memref<1x32xf32, #tpu.memory_space<vmem>>, vector<1x32xf32>
    %4 = vector.broadcast %3 : vector<1x32xf32> to vector<8x32xf32>
    %5 = arith.addf %2, %4 : vector<8x32xf32>
    %cst_5 = arith.constant 0.000000e+00 : f32
    %6 = vector.broadcast %cst_5 : f32 to vector<8x32xf32>
    %7 = arith.subf %6, %5 : vector<8x32xf32>
    %8 = math.exp %7 : vector<8x32xf32>
    %cst_6 = arith.constant 1.000000e+00 : f32
    %9 = vector.broadcast %cst_6 : f32 to vector<8x32xf32>
    %10 = arith.addf %9, %8 : vector<8x32xf32>
    %11 = tpu.reciprocal %10 {approx = true} : vector<8x32xf32> -> vector<8x32xf32>
    %c0_7 = arith.constant 0 : index
    %c0_8 = arith.constant 0 : index
    %12 = vector.load %arg4[%c0_7, %c0_8] : memref<8x32xf32, #tpu.memory_space<vmem>>, vector<8x32xf32>
    tpu.vector_store %arg4[%c0_7, %c0_8], %11 {strides = array<i32>} : memref<8x32xf32, #tpu.memory_space<vmem>>, vector<8x32xf32>,
    return
  }
  func.func @transform_0(%arg0: i32) -> (i32, i32) {
    %c0_i32 = arith.constant 0 : i32
    %c0_i32_0 = arith.constant 0 : i32
    return %arg0, %c0_i32 : i32, i32
  }
  func.func @transform_1(%arg0: i32) -> (i32, i32) {
    %c0_i32 = arith.constant 0 : i32
    %c0_i32_0 = arith.constant 0 : i32
    %c0_i32_1 = arith.constant 0 : i32
    return %c0_i32, %c0_i32_0 : i32, i32
  }
  func.func @transform_2(%arg0: i32) -> (i32, i32) {
    %c0_i32 = arith.constant 0 : i32
    %c0_i32_0 = arith.constant 0 : i32
    %c0_i32_1 = arith.constant 0 : i32
    return %c0_i32, %c0_i32_0 : i32, i32
  }
  func.func @transform_3(%arg0: i32) -> (i32, i32) {
    %c0_i32 = arith.constant 0 : i32
    %c0_i32_0 = arith.constant 0 : i32
    return %arg0, %c0_i32 : i32, i32
  }
}

</mosaic_0001>

<llo_original>
// kernel: generator_forward.1
$region0: #{generator_forward.1}
  #allocation0 [shape = 'u32[]', space=smem, size = 0x4, offset = 0x4, fixed_abs, tag = 'smem constant byte address 0x4 - core index']
  #allocation1 [shape = 'u32[144,128]{1,0:T(1,128)}', space=vmem, size = 0x12000, scoped, tag = 'internal scratch']
  %s0 = inlined_call_operand.vmem [shape: f32[8,32], index: 0, kind: input, shape index: {}]
  %s1 = inlined_call_operand.vmem [shape: f32[32,32], index: 1, kind: input, shape index: {}]
  %s2 = inlined_call_operand.vmem [shape: f32[1,32], index: 2, kind: input, shape index: {}]
  %s3 = inlined_call_operand.vmem [shape: f32[8,32], index: 3, kind: output, shape index: {}]
  %s4 = sld [smem:[#allocation0]]
  $region22: #{generator_forward.1} parent=0
    _
  %s6 = ssub.s32 1, %s4
  %s7 = scalar_select 0, %s6, %s4
  // Predicated region
  $region2: #{generator_forward.1} parent=0 // pred_check
    _
  $region3: #{generator_forward.1} parent=0 // pred_check_branch
    %9 = sbr.rel (0) target = $region5
  $region4: #{generator_forward.1} parent=0 // pred_region
    _
  $region5: #{generator_forward.1} parent=0 // pred_fallthru
    _
  // Predicated region
  $region6: #{generator_forward.1} parent=0 // pred_check
    _
  $region7: #{generator_forward.1} parent=0 // pred_check_branch
    %11 = sbr.rel (0) target = $region9
  $region8: #{generator_forward.1} parent=0 // pred_region
    _
  $region9: #{generator_forward.1} parent=0 // pred_fallthru
    _
  // Predicated region
  $region10: #{generator_forward.1} parent=0 // pred_check
    _
  $region11: #{generator_forward.1} parent=0 // pred_check_branch
    %13 = sbr.rel (0) target = $region13
  $region12: #{generator_forward.1} parent=0 // pred_region
    _
  $region13: #{generator_forward.1} parent=0 // pred_fallthru
    _
  %v14 = vld [vmem:[%s0] sm:$0xff]
  %v15 = vld [vmem:[%s1] sm:$0xff]
  %v16 = vld [vmem:[%s1 + $0x8] sm:$0xff]
  %v17 = vld [vmem:[%s1 + $0x10] sm:$0xff]
  %v18 = vld [vmem:[%s1 + $0x18] sm:$0xff]
  %v19 = vld [vmem:[%s2] sm:$0x1]
  %v21 = vlaneseq
  %v22 = vshrl.u32 %v21, 7
  %v23 = vsub.s32 0, %v22
  %v24 = vrot.slane %v19, %v23
  %vm26 = vcmask 261120
  %v28 = vsel %vm26, %v14, 0
  %30 = vmatprep.subr.mxu0 0.0
  %31 = vmatpush1.msra.mxu0 %v15
  %32 = vmatprep.subr.mxu0 0.0
  %33 = vmatpush1.msra.mxu0 %v16
  %34 = vmatprep.subr.mxu0 0.0
  %35 = vmatpush1.msra.mxu0 %v17
  %36 = vmatprep.subr.mxu0 0.0
  %37 = vmatpush1.msra.mxu0 %v18
  %38 = vmatprep.subr.mxu0 0.0
  %39 = vmatpush1.msra.mxu0 0.0
  %40 = vmatprep.subr.mxu0 0.0
  %41 = vmatpush1.msra.mxu0 0.0
  %42 = vmatprep.subr.mxu0 0.0
  %43 = vmatpush1.msra.mxu0 0.0
  %44 = vmatprep.subr.mxu0 0.0
  %45 = vmatpush1.msra.mxu0 0.0
  %46 = vmatprep.subr.mxu0 0.0
  %47 = vmatpush1.msra.mxu0 0.0
  %48 = vmatprep.subr.mxu0 0.0
  %49 = vmatpush1.msra.mxu0 0.0
  %50 = vmatprep.subr.mxu0 0.0
  %51 = vmatpush1.msra.mxu0 0.0
  %52 = vmatprep.subr.mxu0 0.0
  %53 = vmatpush1.msra.mxu0 0.0
  %54 = vmatprep.subr.mxu0 0.0
  %55 = vmatpush1.msra.mxu0 0.0
  %56 = vmatprep.subr.mxu0 0.0
  %57 = vmatpush1.msra.mxu0 0.0
  %58 = vmatprep.subr.mxu0 0.0
  %59 = vmatpush1.msra.mxu0 0.0
  %60 = vmatprep.subr.mxu0 0.0
  %61 = vmatpush1.msra.mxu0 0.0
  %62 = vmatprep.subr.mxu0 0.0
  %63 = vmatpush1.msra.mxu0 0.0
  %64 = vmatprep.subr.mxu0 0.0
  %65 = vmatpush1.msra.mxu0 0.0
  %66 = vmatprep.subr.mxu0 0.0
  %67 = vmatpush1.msra.mxu0 0.0
  %68 = vmatprep.subr.mxu0 0.0
  %69 = vmatpush1.msra.mxu0 0.0
  %70 = vmatprep.subr.mxu0 0.0
  %71 = vmatpush1.msra.mxu0 0.0
  %72 = vmatprep.subr.mxu0 0.0
  %73 = vmatpush1.msra.mxu0 0.0
  %74 = vmatprep.subr.mxu0 0.0
  %75 = vmatpush1.msra.mxu0 0.0
  %76 = vmatprep.subr.mxu0 0.0
  %77 = vmatpush1.msra.mxu0 0.0
  %78 = vmatprep.subr.mxu0 0.0
  %79 = vmatpush1.msra.mxu0 0.0
  %80 = vmatprep.subr.mxu0 0.0
  %81 = vmatpush1.msra.mxu0 0.0
  %82 = vmatprep.subr.mxu0 0.0
  %83 = vmatpush1.msra.mxu0 0.0
  %84 = vmatprep.subr.mxu0 0.0
  %85 = vmatpush1.msra.mxu0 0.0
  %86 = vmatprep.subr.mxu0 0.0
  %87 = vmatpush1.msra.mxu0 0.0
  %88 = vmatprep.subr.mxu0 0.0
  %89 = vmatpush1.msra.mxu0 0.0
  %90 = vmatprep.subr.mxu0 0.0
  %91 = vmatpush1.msra.mxu0 0.0
  %92 = vmatprep.subr.mxu0 0.0
  %93 = vmatpush1.msra.mxu0 0.0
  %94 = vmatprep.mubr.f32.mxu0 0.0
  %95 = vmatmul.mubr.f32.gmra.mrb[0].mxu0 %v28
  %v96 = vpop.f32.mrb[0].mxu0
  %v97 = vadd.f32 %v24, %v96
  %v98 = vpop.f32.mrb[0].mxu0
  %99 = vdwg.mxu0
  %v100 = vsub.f32 0.0, %v97
  %v101 = vmul.f32 %v100, 1.442695
  %v102 = vpow.pop %v101
  %v103 = vadd.f32 %v102, 1.0
  %v104 = vrcp.pop %v103
  %105 = vst.msk [vmem:[%s3] sm:$0xff] %vm26, %v104
  // Predicated region
  $region14: #{generator_forward.1} parent=0 // pred_check
    _
  $region15: #{generator_forward.1} parent=0 // pred_check_branch
    %107 = sbr.rel (0) target = $region17
  $region16: #{generator_forward.1} parent=0 // pred_region
    _
  $region17: #{generator_forward.1} parent=0 // pred_fallthru
    _
  // Predicated region
  $region18: #{generator_forward.1} parent=0 // pred_check
    _
  $region19: #{generator_forward.1} parent=0 // pred_check_branch
    %109 = sbr.rel (0) target = $region21
  $region20: #{generator_forward.1} parent=0 // pred_region
    _
  $region21: #{generator_forward.1} parent=0 // pred_fallthru
    _

</llo_original>
